<compile_context>
chip_gen: v6e
topology: v6e:2x2x1
jax: 0.10.0
libtpu: 0.0.40
codegen_flags: <defaults>
</compile_context>

<pallas_src>
import functools

import jax
import jax.numpy as jnp
from jax.experimental import pallas as pl
from jax.experimental.pallas import tpu as pltpu


# ---------------------------------------------------------------------------
# VMEM accounting helpers
# ---------------------------------------------------------------------------
def _vmem_budgets():
    """(vmem_limit_bytes, tile_budget_bytes) derived from chip VMEM capacity."""
    try:
        cap = pltpu.get_tpu_info().vmem_capacity_bytes
    except Exception:
        cap = 64 * 1024 * 1024                      # conservative (v7x-sized)
    limit = min((cap * 3) // 4, 96 * 1024 * 1024)   # explicit scoped-VMEM request
    tile_budget = (limit * 2) // 3                  # headroom for compiler scratch
    return int(limit), int(tile_budget)


def _sublane_pad(c, dtype):
    packing = max(1, 4 // jnp.dtype(dtype).itemsize)   # 1 f32, 2 bf16, 4 int8
    mult = 8 * packing
    return ((c + mult - 1) // mult) * mult


def _lane_pad(n):
    return ((n + 127) // 128) * 128


# ---------------------------------------------------------------------------
# Gate MLP:  sigmoid( silu(p @ W1.T) @ W2.T )
#   p: (1, C, 1) f32, w1t = W1.T as (1, C, hidden), w2 = W2 as (1, C, hidden)
# Broadcast-multiply-reduce keeps C on sublanes / hidden on lanes (no in-kernel
# transposes) and lowers for arbitrarily small C / hidden.
# TODO(synk): switch to jnp.dot(..., preferred_element_type=f32) on the MXU
# when C and hidden are both >= 128 (negligible FLOPs for typical SE gates).
# ---------------------------------------------------------------------------
def _gate_mlp(p, w1t, w2):
    h = jnp.sum(p * w1t, axis=1, keepdims=True)     # (1, 1, hidden)
    h = h * jax.nn.sigmoid(h)                       # SiLU
    g = jnp.sum(h * w2, axis=-1, keepdims=True)     # (1, C, 1)
    return jax.nn.sigmoid(g)


# ---------------------------------------------------------------------------
# Fused single-pass kernel: pool + gate + rescale, x read from HBM once.
# ---------------------------------------------------------------------------
def _fused_kernel(x_ref, w1t_ref, w2_ref, o_ref, *, inv_hw):
    xf = x_ref[...].astype(jnp.float32)              # (1, C, HW)
    p = jnp.sum(xf, axis=-1, keepdims=True) * inv_hw
    g = _gate_mlp(p,
                  w1t_ref[...].astype(jnp.float32),
                  w2_ref[...].astype(jnp.float32))
    o_ref[...] = (xf * g).astype(o_ref.dtype)


# ---------------------------------------------------------------------------
# Tiled pass 1: streaming spatial sum with masked tail, gate MLP fused into
# the finalize step.  Output block (1, C, 1) is the resident accumulator.
# ---------------------------------------------------------------------------
def _pool_gate_kernel(x_ref, w1t_ref, w2_ref, g_ref, *, hw, ts, inv_hw):
    s = pl.program_id(1)
    xf = x_ref[...].astype(jnp.float32)              # (1, C, ts)
    if hw % ts != 0:                                 # ceil-div grid: mask tail
        lane = jax.lax.broadcasted_iota(jnp.int32, xf.shape, 2)
        xf = jnp.where(s * ts + lane < hw, xf, 0.0)
    part = jnp.sum(xf, axis=-1, keepdims=True)       # (1, C, 1)

    @pl.when(s == 0)
    def _():
        g_ref[...] = part

    @pl.when(s > 0)
    def _():
        g_ref[...] += part

    @pl.when(s == pl.num_programs(1) - 1)
    def _():
        p = g_ref[...] * inv_hw
        g_ref[...] = _gate_mlp(p,
                               w1t_ref[...].astype(jnp.float32),
                               w2_ref[...].astype(jnp.float32))


# ---------------------------------------------------------------------------
# Tiled pass 2: out = x * gate (gate broadcast along lanes).
# ---------------------------------------------------------------------------
def _scale_kernel(x_ref, g_ref, o_ref):
    g = g_ref[...]                                   # (1, C, 1) f32
    o_ref[...] = (x_ref[...].astype(jnp.float32) * g).astype(o_ref.dtype)


# ---------------------------------------------------------------------------
# Wrapper
# ---------------------------------------------------------------------------
def squeeze_excitation(x, w1, w2, *, tile_budget_bytes=None):
    """x: (B, C, H, W); w1: (hidden, C); w2: (C, hidden). Returns x * gate."""
    B, C, H, W = x.shape
    hidden = w1.shape[0]
    assert w1.shape == (hidden, C) and w2.shape == (C, hidden)

    HW = H * W
    inv_hw = 1.0 / HW
    x3 = x.reshape(B, C, HW)                          # free view; stays NCHW
    itemsize = jnp.dtype(x.dtype).itemsize

    vmem_limit, auto_budget = _vmem_budgets()
    budget = auto_budget if tile_budget_bytes is None else int(tile_budget_bytes)

    c_pad = _sublane_pad(C, x.dtype)
    col_bytes = c_pad * itemsize                      # bytes per lane column of a (C, ts) tile
    hw_lanes = _lane_pad(HW)

    w1t = jnp.transpose(w1).reshape(1, C, hidden)     # W1.T -> (1, C, hidden)
    w2r = w2.reshape(1, C, hidden)                    # W2   -> (1, C, hidden)
    w_itemsize = jnp.dtype(w1.dtype).itemsize
    w_bytes = 2 * 2 * _sublane_pad(C, w1.dtype) * _lane_pad(hidden) * w_itemsize

    # ---- fully fused single-pass path: x read once, written once ----------
    fused_bytes = 4 * col_bytes * hw_lanes + w_bytes  # 2x in + 2x out + weights
    if fused_bytes <= budget:
        y3 = pl.pallas_call(
            functools.partial(_fused_kernel, inv_hw=inv_hw),
            out_shape=jax.ShapeDtypeStruct((B, C, HW), x.dtype),
            grid_spec=pltpu.PrefetchScalarGridSpec(
                num_scalar_prefetch=0,
                grid=(B,),
                in_specs=[
                    pl.BlockSpec((1, C, HW), lambda b: (b, 0, 0)),
                    pl.BlockSpec((1, C, hidden), lambda b: (0, 0, 0)),
                    pl.BlockSpec((1, C, hidden), lambda b: (0, 0, 0)),
                ],
                out_specs=pl.BlockSpec((1, C, HW), lambda b: (b, 0, 0)),
            ),
            compiler_params=pltpu.CompilerParams(
                dimension_semantics=("parallel",),
                vmem_limit_bytes=vmem_limit),
        )(x3, w1t, w2r)
        return y3.reshape(B, C, H, W)

    # ---- tiled two-pass path ------------------------------------------------
    # Pass 1 (pool + gate) only double-buffers its input (accumulator resident)
    # -> factor 2; pass 2 double-buffers in + out -> factor 4.
    def pick_ts(n_bufs, avail):
        max_ts = (avail // (n_bufs * col_bytes)) // 128 * 128
        return min(hw_lanes, max(128, max_ts))

    ts_pool = pick_ts(2, budget - w_bytes)
    ts_scale = pick_ts(4, budget)
    n_pool = pl.cdiv(HW, ts_pool)
    n_scale = pl.cdiv(HW, ts_scale)

    # TODO(synk): on v7x with small B, add a second "parallel" spatial split to
    # the pool grid so both TensorCores stream HBM during pooling.
    gate = pl.pallas_call(
        functools.partial(_pool_gate_kernel, hw=HW, ts=ts_pool, inv_hw=inv_hw),
        out_shape=jax.ShapeDtypeStruct((B, C, 1), jnp.float32),
        grid_spec=pltpu.PrefetchScalarGridSpec(
            num_scalar_prefetch=0,
            grid=(B, n_pool),
            in_specs=[
                pl.BlockSpec((1, C, ts_pool), lambda b, s: (b, 0, s)),
                pl.BlockSpec((1, C, hidden), lambda b, s: (0, 0, 0)),
                pl.BlockSpec((1, C, hidden), lambda b, s: (0, 0, 0)),
            ],
            out_specs=pl.BlockSpec((1, C, 1), lambda b, s: (b, 0, 0)),
        ),
        compiler_params=pltpu.CompilerParams(
            dimension_semantics=("parallel", "arbitrary"),
            vmem_limit_bytes=vmem_limit),
    )(x3, w1t, w2r)

    y3 = pl.pallas_call(
        _scale_kernel,
        out_shape=jax.ShapeDtypeStruct((B, C, HW), x.dtype),
        grid_spec=pltpu.PrefetchScalarGridSpec(
            num_scalar_prefetch=0,
            grid=(B, n_scale),
            in_specs=[
                pl.BlockSpec((1, C, ts_scale), lambda b, s: (b, 0, s)),
                pl.BlockSpec((1, C, 1), lambda b, s: (b, 0, 0)),
            ],
            out_specs=pl.BlockSpec((1, C, ts_scale), lambda b, s: (b, 0, s)),
        ),
        compiler_params=pltpu.CompilerParams(
            dimension_semantics=("parallel", "parallel"),
            vmem_limit_bytes=vmem_limit),
    )(x3, gate)
    return y3.reshape(B, C, H, W)


# ---------------------------------------------------------------------------
# Reference + test
# ---------------------------------------------------------------------------
def _reference(x, w1, w2):
    xf = x.astype(jnp.float32)
    p = jnp.mean(xf, axis=(2, 3))                                # (B, C)
    h = p @ w1.astype(jnp.float32).T                             # (B, hidden)
    h = h * jax.nn.sigmoid(h)                                    # SiLU
    g = jax.nn.sigmoid(h @ w2.astype(jnp.float32).T)             # (B, C)
    return (xf * g[:, :, None, None]).astype(x.dtype)


if __name__ == "__main__":
    key = jax.random.PRNGKey(0)
    kx, k1, k2, kx2 = jax.random.split(key, 4)

    # --- test 1: canonical small shape -> fused single-pass path ----------
    B, C, H, W = 2, 4, 16, 16
    shrinkage_rate = 0.25
    hidden = int(C * shrinkage_rate)                             # = 1
    x = jax.random.normal(kx, (B, C, H, W), dtype=jnp.float32)
    w1 = 0.5 * jax.random.normal(k1, (hidden, C), dtype=jnp.float32)  # Linear(dim, hidden).weight
    w2 = 0.5 * jax.random.normal(k2, (C, hidden), dtype=jnp.float32)  # Linear(hidden, dim).weight

    out = jax.block_until_ready(squeeze_excitation(x, w1, w2))
    ref = _reference(x, w1, w2)
    assert out.shape == (B, C, H, W)
    assert jnp.allclose(out, ref, atol=1e-5, rtol=1e-5)

    # --- test 2: odd spatial size, forced tiled path (masked tail tiles) ---
    H2, W2 = 10, 13                                              # HW = 130, not a 128 multiple
    x2 = jax.random.normal(kx2, (B, C, H2, W2), dtype=jnp.float32)
    out2 = jax.block_until_ready(
        squeeze_excitation(x2, w1, w2, tile_budget_bytes=1))     # force 128-lane tiles / 2-pass path
    ref2 = _reference(x2, w1, w2)
    assert out2.shape == (B, C, H2, W2)
    assert jnp.allclose(out2, ref2, atol=1e-5, rtol=1e-5)

    print("KERNEL_OK")
</pallas_src>

<mosaic_0001>
module attributes {stable_mosaic.version = 11 : i64} {
  func.func @_fused_kernel(%arg0: i32, %arg1: memref<1x4x256xf32, #tpu.memory_space<vmem>>, %arg2: memref<1x4x1xf32, #tpu.memory_space<vmem>>, %arg3: memref<1x4x1xf32, #tpu.memory_space<vmem>>, %arg4: memref<1x4x256xf32, #tpu.memory_space<vmem>>) attributes {dimension_semantics = [#tpu.dimension_semantics<parallel>], iteration_bounds = array<i64: 2>, scalar_prefetch = 0 : i64, scratch_operands = 0 : i64, tpu.core_type = #tpu.core_type<tc>, window_params = [{transform_indices = @transform_0, window_bounds = array<i64: 1, 4, 256>}, {pipeline_mode = #tpu.pipeline_mode<synchronous>, transform_indices = @transform_1, window_bounds = array<i64: 1, 4, 1>}, {pipeline_mode = #tpu.pipeline_mode<synchronous>, transform_indices = @transform_2, window_bounds = array<i64: 1, 4, 1>}, {transform_indices = @transform_3, window_bounds = array<i64: 1, 4, 256>}]} {
    %c0 = arith.constant 0 : index
    %c0_0 = arith.constant 0 : index
    %c0_1 = arith.constant 0 : index
    %0 = vector.load %arg1[%c0, %c0_0, %c0_1] : memref<1x4x256xf32, #tpu.memory_space<vmem>>, vector<1x4x256xf32>
    %cst = arith.constant dense<0.000000e+00> : vector<1x4xf32>
    %1 = vector.multi_reduction <add>, %0, %cst [2] : vector<1x4x256xf32> to vector<1x4xf32>
    %2 = vector.shape_cast %1 : vector<1x4xf32> to vector<1x4x1xf32>
    %cst_2 = arith.constant 3.906250e-03 : f32
    %3 = vector.broadcast %cst_2 : f32 to vector<1x4x1xf32>
    %4 = arith.mulf %2, %3 : vector<1x4x1xf32>
    %c0_3 = arith.constant 0 : index
    %c0_4 = arith.constant 0 : index
    %c0_5 = arith.constant 0 : index
    %5 = vector.load %arg2[%c0_3, %c0_4, %c0_5] : memref<1x4x1xf32, #tpu.memory_space<vmem>>, vector<1x4x1xf32>
    %c0_6 = arith.constant 0 : index
    %c0_7 = arith.constant 0 : index
    %c0_8 = arith.constant 0 : index
    %6 = vector.load %arg3[%c0_6, %c0_7, %c0_8] : memref<1x4x1xf32, #tpu.memory_space<vmem>>, vector<1x4x1xf32>
    %7 = arith.mulf %4, %5 : vector<1x4x1xf32>
    %cst_9 = arith.constant dense<0.000000e+00> : vector<1x1xf32>
    %8 = vector.multi_reduction <add>, %7, %cst_9 [1] : vector<1x4x1xf32> to vector<1x1xf32>
    %9 = vector.shape_cast %8 : vector<1x1xf32> to vector<1x1x1xf32>
    %10 = arith.negf %9 : vector<1x1x1xf32>
    %11 = math.exp %10 : vector<1x1x1xf32>
    %cst_10 = arith.constant 1.000000e+00 : f32
    %12 = vector.broadcast %cst_10 : f32 to vector<1x1x1xf32>
    %13 = arith.addf %12, %11 : vector<1x1x1xf32>
    %14 = arith.divf %12, %13 : vector<1x1x1xf32>
    %15 = arith.mulf %9, %14 : vector<1x1x1xf32>
    %16 = vector.broadcast %15 : vector<1x1x1xf32> to vector<1x4x1xf32>
    %17 = arith.mulf %16, %6 : vector<1x4x1xf32>
    %cst_11 = arith.constant dense<0.000000e+00> : vector<1x4xf32>
    %18 = vector.multi_reduction <add>, %17, %cst_11 [2] : vector<1x4x1xf32> to vector<1x4xf32>
    %19 = vector.shape_cast %18 : vector<1x4xf32> to vector<1x4x1xf32>
    %20 = arith.negf %19 : vector<1x4x1xf32>
    %21 = math.exp %20 : vector<1x4x1xf32>
    %cst_12 = arith.constant 1.000000e+00 : f32
    %22 = vector.broadcast %cst_12 : f32 to vector<1x4x1xf32>
    %23 = arith.addf %22, %21 : vector<1x4x1xf32>
    %24 = arith.divf %22, %23 : vector<1x4x1xf32>
    %25 = vector.broadcast %24 : vector<1x4x1xf32> to vector<1x4x256xf32>
    %26 = arith.mulf %0, %25 : vector<1x4x256xf32>
    %c0_13 = arith.constant 0 : index
    %c0_14 = arith.constant 0 : index
    %c0_15 = arith.constant 0 : index
    %27 = vector.load %arg4[%c0_13, %c0_14, %c0_15] : memref<1x4x256xf32, #tpu.memory_space<vmem>>, vector<1x4x256xf32>
    tpu.vector_store %arg4[%c0_13, %c0_14, %c0_15], %26 {strides = array<i32>} : memref<1x4x256xf32, #tpu.memory_space<vmem>>, vector<1x4x256xf32>,
    return
  }
  func.func @transform_0(%arg0: i32) -> (i32, i32, i32) {
    %c0_i32 = arith.constant 0 : i32
    %c0_i32_0 = arith.constant 0 : i32
    %c0_i32_1 = arith.constant 0 : i32
    return %arg0, %c0_i32, %c0_i32_0 : i32, i32, i32
  }
  func.func @transform_1(%arg0: i32) -> (i32, i32, i32) {
    %c0_i32 = arith.constant 0 : i32
    %c0_i32_0 = arith.constant 0 : i32
    %c0_i32_1 = arith.constant 0 : i32
    %c0_i32_2 = arith.constant 0 : i32
    return %c0_i32, %c0_i32_0, %c0_i32_1 : i32, i32, i32
  }
  func.func @transform_2(%arg0: i32) -> (i32, i32, i32) {
    %c0_i32 = arith.constant 0 : i32
    %c0_i32_0 = arith.constant 0 : i32
    %c0_i32_1 = arith.constant 0 : i32
    %c0_i32_2 = arith.constant 0 : i32
    return %c0_i32, %c0_i32_0, %c0_i32_1 : i32, i32, i32
  }
  func.func @transform_3(%arg0: i32) -> (i32, i32, i32) {
    %c0_i32 = arith.constant 0 : i32
    %c0_i32_0 = arith.constant 0 : i32
    %c0_i32_1 = arith.constant 0 : i32
    return %arg0, %c0_i32, %c0_i32_0 : i32, i32, i32
  }
}

</mosaic_0001>

<llo_original>
// kernel: tpu_custom_call.1
$region0: #{tpu_custom_call.1}
  #allocation0 [shape = 'u32[]', space=smem, size = 0x4, offset = 0x4, fixed_abs, tag = 'smem constant byte address 0x4 - core index']
  #allocation1 [shape = 'u32[144,128]{1,0:T(1,128)}', space=vmem, size = 0x12000, scoped, tag = 'internal scratch']
  %s0 = inlined_call_operand.hbm [shape: f32[2,4,256], index: 0, kind: input, shape index: {}]
  %s1 = inlined_call_operand.vmem [shape: f32[1,4,1], index: 1, kind: input, shape index: {}]
  %s2 = inlined_call_operand.vmem [shape: f32[1,4,1], index: 2, kind: input, shape index: {}]
  %s3 = inlined_call_operand.hbm [shape: f32[2,4,256], index: 3, kind: output, shape index: {}]
  %s4 = sld [smem:[#allocation0]]
  $region49: #{tpu_custom_call.1} parent=0
    _
  %s6 = ssub.s32 1, %s4
  %s7 = scalar_select 0, %s6, %s4
  $region1: #{tpu_custom_call.1} parent=0
    #allocation2 [shape = 'u8[8192]{0}', space=vmem, size = 0x2000, scoped, tag = 'input window, operand 0']
    #allocation3 [shape = 's32[2]{0}', space=sflag, size = 0x8, scoped, tag = 'scoped memory for tpu_custom_call.1']
    #allocation4 [shape = 's32[2]{0}', space=sflag, size = 0x8, scoped, tag = 'scoped memory for tpu_custom_call.1']
    #allocation5 [shape = 'u8[8192]{0}', space=vmem, size = 0x2000, scoped, tag = 'output window, operand 0']
    %8 = vsyncpa [#allocation3], 0
    %s9 = scalar_lea.sflag [#allocation3], 1
    %10 = vsyncpa %s9, 0
    %11 = vsyncpa [#allocation4], 0
    %s12 = scalar_lea.sflag [#allocation4], 1
    %13 = vsyncpa %s12, 0
    loop: start=0, step=1, limit=4
    $region2: #{tpu_custom_call.1} parent=1 // loop_pre_header
      _
    $region3: #{tpu_custom_call.1} parent=1 // loop_header
      %s15 = sphi 0, %s19
      %p16 = scmp.ge.s32.totalorder %s15, 4
      %s25 = sphi 0, %s27
      %s28 = sphi 0, %s25
      %s29 = sphi 0, %s28
      %s45 = sphi 0, %s29
      %s49 = sphi 0, %s49
      %s51 = sphi 0, %s49
      %s52 = sphi 0, %s51
      %s66 = sphi 0, %s52
      %s70 = sphi 0, %s70
      %s72 = sphi 0, %s70
      %s73 = sphi 0, %s72
      %s87 = sphi 0, %s73
      %s93 = sphi 0, %s95
      %s96 = sphi 0, %s93
      %s97 = sphi 0, %s96
      %s113 = sphi 0, %s97
    $region4: #{tpu_custom_call.1} parent=1 // loop_header_branch
      %18 = sbr.rel (%p16) target = $region8
    $region5: #{tpu_custom_call.1} parent=1 // loop_body
      %s20 = ssub.s32 %s15, 1
      %s21 = ssub.s32 %s15, 2
      %s22 = sadd.s32 %s15, 1
      %s23 = ssub.s32 %s15, %s22
      %p24 = scmp.eq.s32.totalorder %s23, 0
      %s26 = sadd.s32 %s25, 1
      %s27 = scalar_select %p24, %s25, %s26
      %p30 = pneg %p24
      %p31 = scmp.eq.s32.totalorder %s15, 1
      %p32 = por %p30, %p31
      %p33 = scmp.ne.s32.totalorder %s25, %s28
      %p34 = scmp.eq.s32.totalorder %s15, 0
      %p35 = por %p33, %p34
      %p36 = scmp.ne.s32.totalorder %s25, %s28
      %p37 = scmp.eq.s32.totalorder %s20, 1
      %p38 = por %p36, %p37
      %p39 = scmp.ne.s32.totalorder %s28, %s29
      %p40 = scmp.eq.s32.totalorder %s20, 0
      %p41 = por %p39, %p40
      %p42 = scmp.ne.s32.totalorder %s28, %s29
      %p43 = scmp.eq.s32.totalorder %s21, 1
      %p44 = por %p42, %p43
      %p46 = scmp.ne.s32.totalorder %s29, %s45
      %p47 = scmp.eq.s32.totalorder %s21, 0
      %p48 = por %p46, %p47
      %s50 = sadd.s32 %s49, 1
      %p53 = scmp.eq.s32.totalorder %s15, 1
      %p54 = scmp.ne.s32.totalorder %s49, %s51
      %p55 = scmp.eq.s32.totalorder %s15, 0
      %p56 = por %p54, %p55
      %p57 = scmp.ne.s32.totalorder %s49, %s51
      %p58 = scmp.eq.s32.totalorder %s20, 1
      %p59 = por %p57, %p58
      %p60 = scmp.ne.s32.totalorder %s51, %s52
      %p61 = scmp.eq.s32.totalorder %s20, 0
      %p62 = por %p60, %p61
      %p63 = scmp.ne.s32.totalorder %s51, %s52
      %p64 = scmp.eq.s32.totalorder %s21, 1
      %p65 = por %p63, %p64
      %p67 = scmp.ne.s32.totalorder %s52, %s66
      %p68 = scmp.eq.s32.totalorder %s21, 0
      %p69 = por %p67, %p68
      %s71 = sadd.s32 %s70, 1
      %p74 = scmp.eq.s32.totalorder %s15, 1
      %p75 = scmp.ne.s32.totalorder %s70, %s72
      %p76 = scmp.eq.s32.totalorder %s15, 0
      %p77 = por %p75, %p76
      %p78 = scmp.ne.s32.totalorder %s70, %s72
      %p79 = scmp.eq.s32.totalorder %s20, 1
      %p80 = por %p78, %p79
      %p81 = scmp.ne.s32.totalorder %s72, %s73
      %p82 = scmp.eq.s32.totalorder %s20, 0
      %p83 = por %p81, %p82
      %p84 = scmp.ne.s32.totalorder %s72, %s73
      %p85 = scmp.eq.s32.totalorder %s21, 1
      %p86 = por %p84, %p85
      %p88 = scmp.ne.s32.totalorder %s73, %s87
      %p89 = scmp.eq.s32.totalorder %s21, 0
      %p90 = por %p88, %p89
      %s91 = ssub.s32 %s15, %s22
      %p92 = scmp.eq.s32.totalorder %s91, 0
      %s94 = sadd.s32 %s93, 1
      %s95 = scalar_select %p92, %s93, %s94
      %p98 = pneg %p92
      %p99 = scmp.eq.s32.totalorder %s15, 1
      %p100 = por %p98, %p99
      %p101 = scmp.ne.s32.totalorder %s93, %s96
      %p102 = scmp.eq.s32.totalorder %s15, 0
      %p103 = por %p101, %p102
      %p104 = scmp.ne.s32.totalorder %s93, %s96
      %p105 = scmp.eq.s32.totalorder %s20, 1
      %p106 = por %p104, %p105
      %p107 = scmp.ne.s32.totalorder %s96, %s97
      %p108 = scmp.eq.s32.totalorder %s20, 0
      %p109 = por %p107, %p108
      %p110 = scmp.ne.s32.totalorder %s96, %s97
      %p111 = scmp.eq.s32.totalorder %s21, 1
      %p112 = por %p110, %p111
      %p114 = scmp.ne.s32.totalorder %s97, %s113
      %p115 = scmp.eq.s32.totalorder %s21, 0
      %p116 = por %p114, %p115
      %p117 = scmp.le.s32.totalorder 1, %s15
      %p118 = scmp.lt.s32.totalorder %s15, 3
      %p119 = pnand %p117, %p118
      %p120 = pneg %p119
      // Predicated region
      $region9: #{tpu_custom_call.1} parent=5 // pred_check
        _
      $region10: #{tpu_custom_call.1} parent=5 // pred_check_branch
        %122 = sbr.rel (%p119) target = $region12
      $region11: #{tpu_custom_call.1} parent=5 // pred_region
        %s123 = ssub.s32 %s15, 1
        // Predicated region
        $region13: #{tpu_custom_call.1} parent=11 // pred_check
          %p124 = pneg %p62
        $region14: #{tpu_custom_call.1} parent=11 // pred_check_branch
          %126 = sbr.rel (%p124) target = $region16
        $region15: #{tpu_custom_call.1} parent=11 // pred_region
          _
        $region16: #{tpu_custom_call.1} parent=11 // pred_fallthru
          _
        // Predicated region
        $region17: #{tpu_custom_call.1} parent=11 // pred_check
          %p127 = pneg %p83
        $region18: #{tpu_custom_call.1} parent=11 // pred_check_branch
          %129 = sbr.rel (%p127) target = $region20
        $region19: #{tpu_custom_call.1} parent=11 // pred_region
          _
        $region20: #{tpu_custom_call.1} parent=11 // pred_fallthru
          _
      $region12: #{tpu_custom_call.1} parent=5 // pred_fallthru
        _
      %p130 = scmp.lt.s32.totalorder %s15, 2
      // Predicated region
      $region21: #{tpu_custom_call.1} parent=5 // pred_check
        %p131 = pneg %p130
      $region22: #{tpu_custom_call.1} parent=5 // pred_check_branch
        %133 = sbr.rel (%p131) target = $region24
      $region23: #{tpu_custom_call.1} parent=5 // pred_region
        // Predicated region
        $region25: #{tpu_custom_call.1} parent=23 // pred_check
          %p134 = pneg %p35
        $region26: #{tpu_custom_call.1} parent=23 // pred_check_branch
          %136 = sbr.rel (%p134) target = $region28
        $region27: #{tpu_custom_call.1} parent=23 // pred_region
          %s137 = sand.u32 %s25, 1
          %s138 = scalar_lea.sflag [#allocation3], %s137
          %s139 = sand.u32 %s25, 1
          %s140 = smul.addr %s139, 8
          %s141 = scalar_lea.vmem [#allocation2], %s140
          %s143 = ssub.s32 128, 128
          %144 = vsyncadd %s138, %s143
          %s145 = smul.addr %s15, 2
          %s146 = smul.addr %s145, 64
          %s147 = scalar_lea.hbm %s0, %s146
          %s149 = sshll.u32 %s141, 4
          %s150 = int_to_ptr.vmem [resolvable:$true] %s149
          %152 = dma.hbm_to_vmem [thread:$0]  %s147, 128, %s150, %s138
        $region28: #{tpu_custom_call.1} parent=23 // pred_fallthru
          _
      $region24: #{tpu_custom_call.1} parent=5 // pred_fallthru
        _
      %p153 = scmp.le.s32.totalorder 1, %s15
      %p154 = scmp.lt.s32.totalorder %s15, 3
      %p155 = pnand %p153, %p154
      %p156 = pneg %p155
      // Predicated region
      $region29: #{tpu_custom_call.1} parent=5 // pred_check
        _
      $region30: #{tpu_custom_call.1} parent=5 // pred_check_branch
        %158 = sbr.rel (%p155) target = $region32
      $region31: #{tpu_custom_call.1} parent=5 // pred_region
        %s159 = ssub.s32 %s15, 1
        %s160 = sand.u32 %s28, 1
        %s161 = scalar_lea.sflag [#allocation3], %s160
        %s162 = sand.u32 %s28, 1
        %s163 = smul.addr %s162, 8
        %s164 = scalar_lea.vmem [#allocation2], %s163
        // Predicated region
        $region33: #{tpu_custom_call.1} parent=31 // pred_check
          %p165 = pneg %p41
        $region34: #{tpu_custom_call.1} parent=31 // pred_check_branch
          %167 = sbr.rel (%p165) target = $region36
        $region35: #{tpu_custom_call.1} parent=31 // pred_region
          %168 = dma.done %s161, 128
        $region36: #{tpu_custom_call.1} parent=31 // pred_fallthru
          _
        %s169 = sand.u32 %s28, 1
        %s170 = scalar_lea.sflag [#allocation3], %s169
        %s171 = sand.u32 %s28, 1
        %s172 = smul.addr %s171, 8
        %s173 = scalar_lea.vmem [#allocation2], %s172
        %p174 = pneg %p41
        %p175 = pneg %p38
        %p176 = pneg %p62
        %p177 = pneg %p59
        %p178 = pneg %p83
        %p179 = pneg %p80
        %p180 = pneg %p109
        %p181 = pneg %p106
        %s182 = sand.u32 %s96, 1
        %s183 = scalar_lea.sflag [#allocation4], %s182
        %s184 = sand.u32 %s96, 1
        %s185 = smul.addr %s184, 8
        %s186 = scalar_lea.vmem [#allocation5], %s185
        %v187 = vld [vmem:[%s164] sm:$0xff]
        %v189 = vcombine.high %v187, %v187
        %vm191 = vcmask 1043456
        %v192 = vsel %vm191, %v187, 0.0
        %v193 = vsel %vm191, %v189, 0.0
        %v194 = vadd.f32 %v192, %v193
        %195 = vadd.xlane.f32.xlu0 %v194
        %v196 = vpop.xlane.xlu0 %195
        %v197 = vmul.f32 %v196, 0.00390625
        %v198 = vld [vmem:[%s1] sm:$0xf]
        %v199 = vld [vmem:[%s2] sm:$0xf]
        %v200 = vmul.f32 %v197, %v198
        %vm201 = vcmask 3072
        %v202 = vsel %vm201, %v200, 0.0
        %v203 = vrot.slane %v202, 4
        %v204 = vadd.f32 %v202, %v203
        %v205 = vrot.slane %v204, 2
        %v206 = vadd.f32 %v204, %v205
        %v207 = vrot.slane %v206, 1
        %v208 = vadd.f32 %v206, %v207
        %v209 = vxor.u32 %v208, 2147483648
        %v210 = vmul.f32 %v209, 1.442695
        %v211 = vpow.pop %v210
        %v212 = vadd.f32 %v211, 1.0
        %v213 = vrcp.pop %v212
        %v214 = vmul.f32 1.0, %v213
        %v215 = vmul.f32 %v208, %v214
        %v216 = vmul.f32 %v215, %v199
        %v217 = vadd.f32 %v216, 0.0
        %v218 = vxor.u32 %v217, 2147483648
        %v219 = vmul.f32 %v218, 1.442695
        %v220 = vpow.pop %v219
        %v221 = vadd.f32 %v220, 1.0
        %v222 = vrcp.pop %v221
        %v223 = vmul.f32 1.0, %v222
        %225 = vset.pattern.permute.xlu0 0
        %226 = vperm.xlu0 %225, %v223
        %v227 = vpop.permute.xlu0 %226
        %v229 = vunpack.c.l.s4 839922192
        %v230 = vunpack.c.0.s8 %v229
        %v231 = vlaneseq
        %v232 = vshrl.u32 %v231, 7
        %v233 = vsub.s32 %v230, %v232
        %v234 = vrot.slane %v227, %v233
        %v236 = vmul.f32 %v187, %v234
        %237 = vst [vmem:[%s186] sm:$0xff] %v236
        %s238 = sand.u32 %s96, 1
        %s239 = scalar_lea.sflag [#allocation4], %s238
        %s240 = sand.u32 %s96, 1
        %s241 = smul.addr %s240, 8
        %s242 = scalar_lea.vmem [#allocation5], %s241
        // Predicated region
        $region37: #{tpu_custom_call.1} parent=31 // pred_check
          %p243 = pneg %p106
        $region38: #{tpu_custom_call.1} parent=31 // pred_check_branch
          %245 = sbr.rel (%p243) target = $region40
        $region39: #{tpu_custom_call.1} parent=31 // pred_region
          %s247 = ssub.s32 128, 128
          %248 = vsyncadd %s239, %s247
          %s249 = smul.addr %s20, 2
          %s250 = smul.addr %s249, 64
          %s251 = scalar_lea.hbm %s3, %s250
          %s253 = sshll.u32 %s242, 4
          %s254 = int_to_ptr.vmem [resolvable:$true] %s253
          %256 = dma.vmem_to_hbm [thread:$0]  %s254, 128, %s251, %s239
        $region40: #{tpu_custom_call.1} parent=31 // pred_fallthru
          _
      $region32: #{tpu_custom_call.1} parent=5 // pred_fallthru
        _
      %p257 = scmp.le.s32.totalorder 2, %s15
      // Predicated region
      $region41: #{tpu_custom_call.1} parent=5 // pred_check
        %p258 = pneg %p257
      $region42: #{tpu_custom_call.1} parent=5 // pred_check_branch
        %260 = sbr.rel (%p258) target = $region44
      $region43: #{tpu_custom_call.1} parent=5 // pred_region
        %s261 = ssub.s32 %s15, 2
        // Predicated region
        $region45: #{tpu_custom_call.1} parent=43 // pred_check
          %p262 = pneg %p112
        $region46: #{tpu_custom_call.1} parent=43 // pred_check_branch
          %264 = sbr.rel (%p262) target = $region48
        $region47: #{tpu_custom_call.1} parent=43 // pred_region
          %s265 = sand.u32 %s97, 1
          %s266 = scalar_lea.sflag [#allocation4], %s265
          %s267 = sand.u32 %s97, 1
          %s268 = smul.addr %s267, 8
          %s269 = scalar_lea.vmem [#allocation5], %s268
          %270 = dma.done %s266, 128
        $region48: #{tpu_custom_call.1} parent=43 // pred_fallthru
          _
      $region44: #{tpu_custom_call.1} parent=5 // pred_fallthru
        _
    $region6: #{tpu_custom_call.1} parent=1 // loop_footer
      %s19 = sadd.s32 1, %s15
    $region7: #{tpu_custom_call.1} parent=1 // loop_footer_branch
      %14 = sbr.rel target = $region3
    $region8: #{tpu_custom_call.1} parent=1 // loop_exit
      _
    %271 = vsyncpa [#allocation3], 1
    %s272 = scalar_lea.sflag [#allocation3], 1
    %273 = vsyncpa %s272, 1
    %274 = vsyncpa [#allocation4], 1
    %s275 = scalar_lea.sflag [#allocation4], 1
    %276 = vsyncpa %s275, 1

</llo_original>
